<compile_context>
chip_gen: v6e
topology: v6e:2x2x1
jax: 0.10.0
libtpu: 0.0.40
codegen_flags: <defaults>
</compile_context>

<pallas_src>
import functools

import jax
import jax.numpy as jnp
from jax.experimental import pallas as pl
from jax.experimental.pallas import tpu as pltpu


def _round_up(v, m):
    return (v + m - 1) // m * m


def _slab_layout(in_dim, hidden, n_actions):
    """Row offsets of each section inside the packed parameter slab."""
    r_w1 = 0
    r_b1 = _round_up(in_dim, 8)          # b1 occupies 1 row of an 8-row block
    r_w2 = r_b1 + 8
    r_b2 = r_w2 + _round_up(hidden, 8)   # b2 occupies 1 row of an 8-row block
    n_rows = r_b2 + 8
    n_cols = max(hidden, n_actions)
    return r_w1, r_b1, r_w2, r_b2, n_rows, n_cols


def pack_params(w1, b1, w2, b2):
    """One-time packing of PyTorch-layout parameters into a single f32 slab.

    w1: [hidden, in_dim], b1: [hidden], w2: [n_actions, hidden], b2: [n_actions]
    The slab holds w1.T, b1, w2.T, b2 at 8-row-aligned offsets.
    """
    hidden, in_dim = w1.shape
    n_actions = w2.shape[0]
    r_w1, r_b1, r_w2, r_b2, n_rows, n_cols = _slab_layout(in_dim, hidden, n_actions)
    slab = jnp.zeros((n_rows, n_cols), jnp.float32)
    slab = slab.at[r_w1:r_w1 + in_dim, :hidden].set(w1.T.astype(jnp.float32))
    slab = slab.at[r_b1, :hidden].set(b1.astype(jnp.float32))
    slab = slab.at[r_w2:r_w2 + hidden, :n_actions].set(w2.T.astype(jnp.float32))
    slab = slab.at[r_b2, :n_actions].set(b2.astype(jnp.float32))
    return slab


def _mlp_kernel(x_ref, p_ref, o_ref, *, in_dim, hidden, n_actions,
                r_b1, r_w2, r_b2):
    x = x_ref[...]                                     # [B, in_dim] f32
    # Linear(input_size -> hidden) + ReLU
    w1t = p_ref[0:in_dim, 0:hidden]                    # [in_dim, hidden]
    b1 = p_ref[r_b1:r_b1 + 1, 0:hidden]                # [1, hidden]
    h = jnp.dot(x, w1t, preferred_element_type=jnp.float32) + b1
    h = jnp.maximum(h, 0.0)                            # nn.ReLU
    # Linear(hidden -> n_actions)
    w2t = p_ref[r_w2:r_w2 + hidden, 0:n_actions]       # [hidden, n_actions]
    b2 = p_ref[r_b2:r_b2 + 1, 0:n_actions]             # [1, n_actions]
    o = jnp.dot(h, w2t, preferred_element_type=jnp.float32) + b2
    o_ref[...] = o.astype(o_ref.dtype)


def net_forward(x, packed_params, *, in_dim, hidden, n_actions):
    """Forward pass: x [B, in_dim] -> logits [B, n_actions].

    Works for any batch B; callers should batch many rows per call to
    amortize launch overhead (kernel body is batch-size agnostic).
    """
    B = x.shape[0]
    assert x.shape[1] == in_dim
    _, r_b1, r_w2, r_b2, n_rows, n_cols = _slab_layout(in_dim, hidden, n_actions)
    assert packed_params.shape == (n_rows, n_cols)

    flops = 2 * B * in_dim * hidden + 2 * B * hidden * n_actions
    bytes_accessed = 4 * (B * in_dim + n_rows * n_cols + B * n_actions)

    kernel = functools.partial(
        _mlp_kernel, in_dim=in_dim, hidden=hidden, n_actions=n_actions,
        r_b1=r_b1, r_w2=r_w2, r_b2=r_b2)

    return pl.pallas_call(
        kernel,
        out_shape=jax.ShapeDtypeStruct((B, n_actions), x.dtype),
        in_specs=[
            pl.BlockSpec(memory_space=pltpu.MemorySpace.VMEM),   # x
            pl.BlockSpec(memory_space=pltpu.MemorySpace.VMEM),   # packed params
        ],
        out_specs=pl.BlockSpec(memory_space=pltpu.MemorySpace.VMEM),
        cost_estimate=pl.CostEstimate(
            flops=flops, transcendentals=0, bytes_accessed=bytes_accessed),
    )(x, packed_params)


def _reference(x, w1, b1, w2, b2):
    h = jnp.maximum(x @ w1.T + b1, 0.0)
    return h @ w2.T + b2


if __name__ == "__main__":
    # Defaults from the module: n_actions=5, hidden_layer_size=10, n_hidden_layers=1
    batch = 8
    input_size = 32
    hidden = 10
    n_actions = 5

    key = jax.random.PRNGKey(0)
    k1, k2, k3, k4, k5 = jax.random.split(key, 5)

    # Deterministic synthetic parameters (PyTorch nn.Linear shapes).
    w1 = jax.random.normal(k1, (hidden, input_size), jnp.float32) * 0.1
    b1 = jax.random.normal(k2, (hidden,), jnp.float32) * 0.1
    w2 = jax.random.normal(k3, (n_actions, hidden), jnp.float32) * 0.1
    b2 = jax.random.normal(k4, (n_actions,), jnp.float32) * 0.1

    x = jax.random.normal(k5, (batch, input_size), jnp.float32)

    # One-time parameter packing (hoisted out of the per-call path).
    packed = jax.block_until_ready(pack_params(w1, b1, w2, b2))

    out = net_forward(x, packed, in_dim=input_size, hidden=hidden,
                      n_actions=n_actions)
    out = jax.block_until_ready(out)

    ref = _reference(x, w1, b1, w2, b2)
    assert out.shape == (batch, n_actions)
    assert jnp.allclose(out, ref, atol=1e-5, rtol=1e-5), "mismatch vs reference"

    print("KERNEL_OK")
</pallas_src>

<mosaic_0001>
module attributes {stable_mosaic.version = 11 : i64} {
  func.func @_mlp_kernel(%arg0: memref<8x32xf32, #tpu.memory_space<vmem>>, %arg1: memref<64x10xf32, #tpu.memory_space<vmem>>, %arg2: memref<8x5xf32, #tpu.memory_space<vmem>>) attributes {dimension_semantics = [], scalar_prefetch = 0 : i64, scratch_operands = 0 : i64, tpu.core_type = #tpu.core_type<tc>} {
    %c0 = arith.constant 0 : index
    %c0_0 = arith.constant 0 : index
    %0 = vector.load %arg0[%c0, %c0_0] : memref<8x32xf32, #tpu.memory_space<vmem>>, vector<8x32xf32>
    %c0_1 = arith.constant 0 : index
    %c0_2 = arith.constant 0 : index
    %1 = vector.load %arg1[%c0_1, %c0_2] : memref<64x10xf32, #tpu.memory_space<vmem>>, vector<32x10xf32>
    %c32 = arith.constant 32 : index
    %c0_3 = arith.constant 0 : index
    %2 = vector.load %arg1[%c32, %c0_3] : memref<64x10xf32, #tpu.memory_space<vmem>>, vector<1x10xf32>
    %cst = arith.constant dense<0.000000e+00> : vector<8x10xf32>
    %3 = tpu.matmul %0, %1, %cst {dimension_numbers = #tpu.dot_dimension_numbers<[1], [0], [0], [1], [0, 0, 1, 1], [], []>} : vector<8x32xf32>, vector<32x10xf32>, vector<8x10xf32> -> vector<8x10xf32>
    %4 = vector.broadcast %2 : vector<1x10xf32> to vector<8x10xf32>
    %5 = arith.addf %3, %4 : vector<8x10xf32>
    %cst_4 = arith.constant 0.000000e+00 : f32
    %6 = vector.broadcast %cst_4 : f32 to vector<8x10xf32>
    %7 = arith.maximumf %5, %6 : vector<8x10xf32>
    %c40 = arith.constant 40 : index
    %c0_5 = arith.constant 0 : index
    %8 = vector.load %arg1[%c40, %c0_5] : memref<64x10xf32, #tpu.memory_space<vmem>>, vector<10x5xf32>
    %c56 = arith.constant 56 : index
    %c0_6 = arith.constant 0 : index
    %9 = vector.load %arg1[%c56, %c0_6] : memref<64x10xf32, #tpu.memory_space<vmem>>, vector<1x5xf32>
    %cst_7 = arith.constant dense<0.000000e+00> : vector<8x5xf32>
    %10 = tpu.matmul %7, %8, %cst_7 {dimension_numbers = #tpu.dot_dimension_numbers<[1], [0], [0], [1], [0, 0, 1, 1], [], []>} : vector<8x10xf32>, vector<10x5xf32>, vector<8x5xf32> -> vector<8x5xf32>
    %11 = vector.broadcast %9 : vector<1x5xf32> to vector<8x5xf32>
    %12 = arith.addf %10, %11 : vector<8x5xf32>
    %c0_8 = arith.constant 0 : index
    %c0_9 = arith.constant 0 : index
    %13 = vector.load %arg2[%c0_8, %c0_9] : memref<8x5xf32, #tpu.memory_space<vmem>>, vector<8x5xf32>
    tpu.vector_store %arg2[%c0_8, %c0_9], %12 {strides = array<i32>} : memref<8x5xf32, #tpu.memory_space<vmem>>, vector<8x5xf32>,
    return
  }
}

</mosaic_0001>

<llo_original>
// kernel: tpu_custom_call.1
$region0: #{tpu_custom_call.1}
  #allocation0 [shape = 'u32[]', space=smem, size = 0x4, offset = 0x4, fixed_abs, tag = 'smem constant byte address 0x4 - core index']
  #allocation1 [shape = 'u32[144,128]{1,0:T(1,128)}', space=vmem, size = 0x12000, scoped, tag = 'internal scratch']
  %s0 = inlined_call_operand.vmem [shape: f32[8,32], index: 0, kind: input, shape index: {}]
  %s1 = inlined_call_operand.vmem [shape: f32[64,10], index: 1, kind: input, shape index: {}]
  %s2 = inlined_call_operand.hbm [shape: f32[8,5], index: 2, kind: output, shape index: {}]
  %s3 = sld [smem:[#allocation0]]
  $region18: #{tpu_custom_call.1} parent=0
    _
  %s5 = ssub.s32 1, %s3
  %s6 = scalar_select 0, %s5, %s3
  $region1: #{tpu_custom_call.1} parent=0
    #allocation2 [shape = 'u8[4096]{0}', space=vmem, size = 0x1000, scoped, tag = 'output window, operand 0, single buffered']
    #allocation3 [shape = 's32[1]{0}', space=sflag, size = 0x4, scoped, tag = 'scoped memory for tpu_custom_call.1']
    %7 = vsyncpa [#allocation3], 0
    // Predicated region
    $region2: #{tpu_custom_call.1} parent=1 // pred_check
      _
    $region3: #{tpu_custom_call.1} parent=1 // pred_check_branch
      %9 = sbr.rel (0) target = $region5
    $region4: #{tpu_custom_call.1} parent=1 // pred_region
      _
    $region5: #{tpu_custom_call.1} parent=1 // pred_fallthru
      _
    // Predicated region
    $region6: #{tpu_custom_call.1} parent=1 // pred_check
      _
    $region7: #{tpu_custom_call.1} parent=1 // pred_check_branch
      %11 = sbr.rel (0) target = $region9
    $region8: #{tpu_custom_call.1} parent=1 // pred_region
      _
    $region9: #{tpu_custom_call.1} parent=1 // pred_fallthru
      _
    %v12 = vld [vmem:[%s0] sm:$0xff]
    %v13 = vld [vmem:[%s1] sm:$0xff]
    %v14 = vld [vmem:[%s1 + $0x8] sm:$0xff]
    %v15 = vld [vmem:[%s1 + $0x10] sm:$0xff]
    %v16 = vld [vmem:[%s1 + $0x18] sm:$0xff]
    %v17 = vld [vmem:[%s1 + $0x20] sm:$0x1]
    %v18 = vlaneseq
    %v19 = vshrl.u32 %v18, 7
    %v20 = vsub.s32 0, %v19
    %v21 = vrot.slane %v17, %v20
    %vm22 = vcmask 261120
    %v24 = vsel %vm22, %v12, 0
    %26 = vmatprep.subr.mxu0 0.0
    %27 = vmatpush1.msra.mxu0 0.0
    %28 = vmatprep.subr.mxu0 0.0
    %29 = vmatpush1.msra.mxu0 0.0
    %30 = vmatprep.subr.mxu0 0.0
    %31 = vmatpush1.msra.mxu0 0.0
    %32 = vmatprep.subr.mxu0 0.0
    %33 = vmatpush1.msra.mxu0 0.0
    %34 = vmatprep.subr.mxu0 0.0
    %35 = vmatpush1.msra.mxu0 0.0
    %36 = vmatprep.subr.mxu0 0.0
    %37 = vmatpush1.msra.mxu0 0.0
    %38 = vmatprep.subr.mxu0 0.0
    %39 = vmatpush1.msra.mxu0 0.0
    %40 = vmatprep.subr.mxu0 0.0
    %41 = vmatpush1.msra.mxu0 0.0
    %42 = vmatprep.subr.mxu0 0.0
    %43 = vmatpush1.msra.mxu0 0.0
    %44 = vmatprep.subr.mxu0 0.0
    %45 = vmatpush1.msra.mxu0 0.0
    %46 = vmatprep.subr.mxu0 0.0
    %47 = vmatpush1.msra.mxu0 0.0
    %48 = vmatprep.subr.mxu0 0.0
    %49 = vmatpush1.msra.mxu0 0.0
    %50 = vmatprep.subr.mxu0 0.0
    %51 = vmatpush1.msra.mxu0 %v16
    %52 = vmatprep.subr.mxu0 0.0
    %53 = vmatpush1.msra.mxu0 %v15
    %54 = vmatprep.subr.mxu0 0.0
    %55 = vmatpush1.msra.mxu0 %v14
    %56 = vmatprep.subr.mxu0 0.0
    %57 = vmatpush1.msra.mxu0 %v13
    %58 = vmatprep.subr.mxu0 0.0
    %59 = vmatpush2.msra.mxu0 0.0
    %60 = vmatprep.subr.mxu0 0.0
    %61 = vmatpush2.msra.mxu0 0.0
    %62 = vmatprep.subr.mxu0 0.0
    %63 = vmatpush2.msra.mxu0 0.0
    %64 = vmatprep.subr.mxu0 0.0
    %65 = vmatpush2.msra.mxu0 0.0
    %66 = vmatprep.subr.mxu0 0.0
    %67 = vmatpush2.msra.mxu0 0.0
    %68 = vmatprep.subr.mxu0 0.0
    %69 = vmatpush2.msra.mxu0 0.0
    %70 = vmatprep.subr.mxu0 0.0
    %71 = vmatpush2.msra.mxu0 0.0
    %72 = vmatprep.subr.mxu0 0.0
    %73 = vmatpush2.msra.mxu0 0.0
    %74 = vmatprep.subr.mxu0 0.0
    %75 = vmatpush2.msra.mxu0 0.0
    %76 = vmatprep.subr.mxu0 0.0
    %77 = vmatpush2.msra.mxu0 0.0
    %78 = vmatprep.subr.mxu0 0.0
    %79 = vmatpush2.msra.mxu0 0.0
    %80 = vmatprep.subr.mxu0 0.0
    %81 = vmatpush2.msra.mxu0 0.0
    %82 = vmatprep.subr.mxu0 0.0
    %83 = vmatpush2.msra.mxu0 0.0
    %84 = vmatprep.subr.mxu0 0.0
    %85 = vmatpush2.msra.mxu0 0.0
    %86 = vmatprep.subr.mxu0 0.0
    %87 = vmatpush2.msra.mxu0 0.0
    %88 = vmatprep.subr.mxu0 0.0
    %89 = vmatpush2.msra.mxu0 0.0
    %90 = vmatprep.mubr.f32.mxu0 0.0
    %91 = vmatmul.mubr.f32.gmra.mxu0 %v24
    %v92 = vpop.f32.mrf.mxu0
    %v93 = vadd.f32 %v21, %v92
    %v94 = vpop.f32.mrf.mxu0
    %95 = vdwg.mxu0
    %v96 = vmax.f32 %v93, 0.0
    %v97 = vld [vmem:[%s1 + $0x28] sm:$0xff]
    %v98 = vld [vmem:[%s1 + $0x30] sm:$0x3]
    %v99 = vld [vmem:[%s1 + $0x38] sm:$0x1]
    %v100 = vlaneseq
    %v101 = vshrl.u32 %v100, 7
    %v102 = vsub.s32 0, %v101
    %v103 = vrot.slane %v99, %v102
    %vm104 = vcmask 80896
    %v106 = vsel %vm104, %v96, 0
    %vm108 = vcmask 1041408
    %v110 = vsel %vm108, %v98, 0
    %112 = vmatprep.subr.mxu0 0.0
    %113 = vmatpush1.msra.mxu0 0.0
    %114 = vmatprep.subr.mxu0 0.0
    %115 = vmatpush1.msra.mxu0 0.0
    %116 = vmatprep.subr.mxu0 0.0
    %117 = vmatpush1.msra.mxu0 0.0
    %118 = vmatprep.subr.mxu0 0.0
    %119 = vmatpush1.msra.mxu0 0.0
    %120 = vmatprep.subr.mxu0 0.0
    %121 = vmatpush1.msra.mxu0 0.0
    %122 = vmatprep.subr.mxu0 0.0
    %123 = vmatpush1.msra.mxu0 0.0
    %124 = vmatprep.subr.mxu0 0.0
    %125 = vmatpush1.msra.mxu0 0.0
    %126 = vmatprep.subr.mxu0 0.0
    %127 = vmatpush1.msra.mxu0 0.0
    %128 = vmatprep.subr.mxu0 0.0
    %129 = vmatpush1.msra.mxu0 0.0
    %130 = vmatprep.subr.mxu0 0.0
    %131 = vmatpush1.msra.mxu0 0.0
    %132 = vmatprep.subr.mxu0 0.0
    %133 = vmatpush1.msra.mxu0 0.0
    %134 = vmatprep.subr.mxu0 0.0
    %135 = vmatpush1.msra.mxu0 0.0
    %136 = vmatprep.subr.mxu0 0.0
    %137 = vmatpush1.msra.mxu0 0.0
    %138 = vmatprep.subr.mxu0 0.0
    %139 = vmatpush1.msra.mxu0 0.0
    %140 = vmatprep.subr.mxu0 0.0
    %141 = vmatpush1.msra.mxu0 %v110
    %142 = vmatprep.subr.mxu0 0.0
    %143 = vmatpush1.msra.mxu0 %v97
    %144 = vmatprep.subr.mxu0 0.0
    %145 = vmatpush2.msra.mxu0 0.0
    %146 = vmatprep.subr.mxu0 0.0
    %147 = vmatpush2.msra.mxu0 0.0
    %148 = vmatprep.subr.mxu0 0.0
    %149 = vmatpush2.msra.mxu0 0.0
    %150 = vmatprep.subr.mxu0 0.0
    %151 = vmatpush2.msra.mxu0 0.0
    %152 = vmatprep.subr.mxu0 0.0
    %153 = vmatpush2.msra.mxu0 0.0
    %154 = vmatprep.subr.mxu0 0.0
    %155 = vmatpush2.msra.mxu0 0.0
    %156 = vmatprep.subr.mxu0 0.0
    %157 = vmatpush2.msra.mxu0 0.0
    %158 = vmatprep.subr.mxu0 0.0
    %159 = vmatpush2.msra.mxu0 0.0
    %160 = vmatprep.subr.mxu0 0.0
    %161 = vmatpush2.msra.mxu0 0.0
    %162 = vmatprep.subr.mxu0 0.0
    %163 = vmatpush2.msra.mxu0 0.0
    %164 = vmatprep.subr.mxu0 0.0
    %165 = vmatpush2.msra.mxu0 0.0
    %166 = vmatprep.subr.mxu0 0.0
    %167 = vmatpush2.msra.mxu0 0.0
    %168 = vmatprep.subr.mxu0 0.0
    %169 = vmatpush2.msra.mxu0 0.0
    %170 = vmatprep.subr.mxu0 0.0
    %171 = vmatpush2.msra.mxu0 0.0
    %172 = vmatprep.subr.mxu0 0.0
    %173 = vmatpush2.msra.mxu0 0.0
    %174 = vmatprep.subr.mxu0 0.0
    %175 = vmatpush2.msra.mxu0 0.0
    %176 = vmatprep.mubr.f32.mxu0 0.0
    %177 = vmatmul.mubr.f32.gmra.mxu0 %v106
    %v178 = vpop.f32.mrf.mxu0
    %v179 = vadd.f32 %v103, %v178
    %v180 = vpop.f32.mrf.mxu0
    %181 = vdwg.mxu0
    %vm182 = vcmask 39936
    %183 = vst.msk [vmem:[#allocation2] sm:$0xff] %vm182, %v179
    // Predicated region
    $region10: #{tpu_custom_call.1} parent=1 // pred_check
      _
    $region11: #{tpu_custom_call.1} parent=1 // pred_check_branch
      %185 = sbr.rel (0) target = $region13
    $region12: #{tpu_custom_call.1} parent=1 // pred_region
      %s187 = ssub.s32 128, 128
      %188 = vsyncadd [#allocation3], %s187
      %s190 = sshll.u32 [#allocation2], 4
      %s191 = int_to_ptr.vmem [resolvable:$true] %s190
      %193 = dma.vmem_to_hbm [thread:$0]  %s191, 128, %s2, [#allocation3]
    $region13: #{tpu_custom_call.1} parent=1 // pred_fallthru
      _
    // Predicated region
    $region14: #{tpu_custom_call.1} parent=1 // pred_check
      _
    $region15: #{tpu_custom_call.1} parent=1 // pred_check_branch
      %195 = sbr.rel (0) target = $region17
    $region16: #{tpu_custom_call.1} parent=1 // pred_region
      %196 = dma.done [#allocation3], 128
    $region17: #{tpu_custom_call.1} parent=1 // pred_fallthru
      _
    %197 = vsyncpa [#allocation3], 1

</llo_original>
